<compile_context>
chip_gen: v5e
topology: v5e:2x2
jax: 0.10.0
libtpu: 0.0.40
codegen_flags: <defaults>
</compile_context>

<pallas_src>
import functools

import jax
import jax.numpy as jnp
from jax.experimental import pallas as pl
from jax.experimental.pallas import tpu as pltpu

SUBLANE = 8
H1_PAD = 128   # 100 -> 128
H2_PAD = 512   # 500 -> 512
OUT_PAD = 8    # 1   -> 8 (column 0 is the real logit; rest sliced off)


def _round_up(n, m):
    return (n + m - 1) // m * m


def mlp1_kernel(x_ref, m1_ref, b1_ref, w2_ref, b2_ref, w3_ref, b3_ref,
                w4_ref, b4_ref, out_ref):
    """One batch tile: bf16-operand / f32-accumulate MXU chain."""
    x = x_ref[...]  # (TB, H*W) one-hot rows, bf16, lane-dense

    # Layer 1 (coordinate extraction fused into M1 = coord_matrix @ W1) + ReLU.
    h1 = jnp.dot(x, m1_ref[...], preferred_element_type=jnp.float32) + b1_ref[...]
    h1 = jnp.maximum(h1, 0.0).astype(jnp.bfloat16)

    # Layer 2: Linear(100->500) padded to (128, 512) + ReLU.
    h2 = jnp.dot(h1, w2_ref[...], preferred_element_type=jnp.float32) + b2_ref[...]
    h2 = jnp.maximum(h2, 0.0).astype(jnp.bfloat16)

    # Layer 3: Linear(500->100) padded to (512, 128) + ReLU.
    h3 = jnp.dot(h2, w3_ref[...], preferred_element_type=jnp.float32) + b3_ref[...]
    h3 = jnp.maximum(h3, 0.0).astype(jnp.bfloat16)

    # Layer 4: Linear(100->1) padded to (128, 8) + sigmoid (EUP).
    # Padded output columns see logit 0 -> sigmoid = 0.5; discarded in wrapper.
    logit = jnp.dot(h3, w4_ref[...], preferred_element_type=jnp.float32) + b4_ref[...]
    out_ref[...] = jax.nn.sigmoid(logit)


def fuse_and_pad_params(params, H, W):
    """Fold coord extraction into layer 1, pad to lane multiples, cast to bf16."""
    w1, b1, w2, b2, w3, b3, w4, b4 = params
    HW = H * W
    flat = jnp.arange(HW, dtype=jnp.int32)
    coord_mat = jnp.stack([flat // W, flat % W], axis=1).astype(jnp.float32)  # (HW, 2)
    m1 = coord_mat @ w1                                                       # (HW, 100)

    def pad2(a, rows, cols, dtype):
        a = jnp.pad(a, ((0, rows - a.shape[0]), (0, cols - a.shape[1])))
        return a.astype(dtype)

    bf16, f32 = jnp.bfloat16, jnp.float32
    return (pad2(m1, HW, H1_PAD, bf16),      pad2(b1, 1, H1_PAD, f32),
            pad2(w2, H1_PAD, H2_PAD, bf16),  pad2(b2, 1, H2_PAD, f32),
            pad2(w3, H2_PAD, H1_PAD, bf16),  pad2(b3, 1, H1_PAD, f32),
            pad2(w4, H1_PAD, OUT_PAD, bf16), pad2(b4, 1, OUT_PAD, f32))


def _choose_tiling(B, block_b, target_steps=2):
    """Pad-aware batch tile: >=2 grid steps when B > 128 (v7x megacore),
    tile rounded to 128 rows, pad waste bounded by ~128 rows per step."""
    if B <= 128:
        return _round_up(max(B, 1), SUBLANE), 1
    steps = max(target_steps, pl.cdiv(B, block_b))
    tb = _round_up(pl.cdiv(B, steps), 128)
    return tb, steps


@functools.partial(jax.jit, static_argnames=("block_b",))
def mlp1_forward(x, fused_params, block_b=1024):
    """x: (B, H, W) one-hot grids. Returns sigmoid output of shape (B, 1).

    block_b: max batch tile (M dim of each matmul). 1024 fits comfortably in
    v5e's 16 MiB default scoped VMEM; up to ~2048 is fine on v6e/v7x with the
    explicit 32 MiB vmem limit set below.
    """
    m1p, b1p, w2p, b2p, w3p, b3p, w4p, b4p = fused_params
    B = x.shape[0]
    HW = m1p.shape[0]
    x_flat = x.reshape(B, HW).astype(jnp.bfloat16)          # lane-dense, bf16

    tb, n_steps = _choose_tiling(B, block_b)
    b_pad = tb * n_steps
    if b_pad != B:
        x_flat = jnp.pad(x_flat, ((0, b_pad - B), (0, 0)))  # zero rows -> coords (0,0)

    const = lambda i: (0, 0)                                 # weights stay resident
    out = pl.pallas_call(
        mlp1_kernel,
        out_shape=jax.ShapeDtypeStruct((b_pad, OUT_PAD), jnp.float32),
        grid_spec=pltpu.PrefetchScalarGridSpec(
            num_scalar_prefetch=0,
            grid=(n_steps,),
            in_specs=[
                pl.BlockSpec((tb, HW), lambda i: (i, 0)),   # x tile (pipelined)
                pl.BlockSpec(m1p.shape, const),
                pl.BlockSpec(b1p.shape, const),
                pl.BlockSpec(w2p.shape, const),
                pl.BlockSpec(b2p.shape, const),
                pl.BlockSpec(w3p.shape, const),
                pl.BlockSpec(b3p.shape, const),
                pl.BlockSpec(w4p.shape, const),
                pl.BlockSpec(b4p.shape, const),
            ],
            out_specs=pl.BlockSpec((tb, OUT_PAD), lambda i: (i, 0)),
        ),
        compiler_params=pltpu.CompilerParams(
            dimension_semantics=("parallel",),
            vmem_limit_bytes=32 << 20),
    )(x_flat, m1p, b1p, w2p, b2p, w3p, b3p, w4p, b4p)

    return out[:B, 0:1]


def init_linear(key, fan_in, fan_out):
    """Deterministic init mimicking nn.Linear's default U(-1/sqrt(fan_in), ...)."""
    kw, kb = jax.random.split(key)
    bound = 1.0 / jnp.sqrt(jnp.float32(fan_in))
    w = jax.random.uniform(kw, (fan_in, fan_out), jnp.float32, -bound, bound)
    b = jax.random.uniform(kb, (1, fan_out), jnp.float32, -bound, bound)
    return w, b


def reference_forward(x, params):
    """Plain-JAX f32 reference of the PyTorch forward."""
    w1, b1, w2, b2, w3, b3, w4, b4 = params
    B, H, W = x.shape
    flat_idx = jnp.argmax(x.reshape(B, H * W), axis=1)
    coords = jnp.stack([flat_idx // W, flat_idx % W], axis=1).astype(jnp.float32)
    h = jnp.maximum(coords @ w1 + b1, 0.0)
    h = jnp.maximum(h @ w2 + b2, 0.0)
    h = jnp.maximum(h @ w3 + b3, 0.0)
    return jax.nn.sigmoid(h @ w4 + b4)


def reference_forward_bf16(x, params, H, W):
    """Reference that emulates the kernel's bf16-operand / f32-accumulate path."""
    w1, b1, w2, b2, w3, b3, w4, b4 = params
    bf = lambda a: a.astype(jnp.bfloat16).astype(jnp.float32)
    B = x.shape[0]
    HW = H * W
    flat = jnp.arange(HW, dtype=jnp.int32)
    coord_mat = jnp.stack([flat // W, flat % W], axis=1).astype(jnp.float32)
    m1 = coord_mat @ w1
    xf = bf(x.reshape(B, HW).astype(jnp.float32))
    h = jnp.maximum(xf @ bf(m1) + b1, 0.0)
    h = jnp.maximum(bf(h) @ bf(w2) + b2, 0.0)
    h = jnp.maximum(bf(h) @ bf(w3) + b3, 0.0)
    return jax.nn.sigmoid(bf(h) @ bf(w4) + b4)


if __name__ == "__main__":
    key = jax.random.PRNGKey(0)
    k_pos_a, k_pos_b, k1, k2, k3, k4 = jax.random.split(key, 6)

    H, W = 16, 16
    params = (*init_linear(k1, 2, 100),
              *init_linear(k2, 100, 500),
              *init_linear(k3, 500, 100),
              *init_linear(k4, 100, 1))
    fused = fuse_and_pad_params(params, H, W)

    def make_onehot(k, B):
        pos = jax.random.randint(k, (B,), 0, H * W)
        x = jnp.zeros((B, H * W), jnp.float32).at[jnp.arange(B), pos].set(1.0)
        return x.reshape(B, H, W)

    # Small case (B=2) plus a multi-tile case to exercise padding + 2 grid steps.
    for B, k in ((2, k_pos_a), (300, k_pos_b)):
        x = make_onehot(k, B)
        out = jax.block_until_ready(mlp1_forward(x, fused))
        assert out.shape == (B, 1), out.shape
        # Tight check vs a reference that reproduces the bf16 quantization.
        ref_bf16 = reference_forward_bf16(x, params, H, W)
        assert jnp.allclose(out, ref_bf16, atol=1e-3, rtol=1e-3), (
            B, float(jnp.max(jnp.abs(out - ref_bf16))))
        # Loose check vs the full-f32 reference (bf16 quantization error only).
        ref_f32 = reference_forward(x, params)
        assert jnp.allclose(out, ref_f32, atol=2e-2, rtol=2e-2), (
            B, float(jnp.max(jnp.abs(out - ref_f32))))

    print("KERNEL_OK")
</pallas_src>

<mosaic_0001>
module attributes {stable_mosaic.version = 11 : i64} {
  func.func @mlp1_kernel(%arg0: i32, %arg1: memref<8x256xbf16, #tpu.memory_space<vmem>>, %arg2: memref<256x128xbf16, #tpu.memory_space<vmem>>, %arg3: memref<1x128xf32, #tpu.memory_space<vmem>>, %arg4: memref<128x512xbf16, #tpu.memory_space<vmem>>, %arg5: memref<1x512xf32, #tpu.memory_space<vmem>>, %arg6: memref<512x128xbf16, #tpu.memory_space<vmem>>, %arg7: memref<1x128xf32, #tpu.memory_space<vmem>>, %arg8: memref<128x8xbf16, #tpu.memory_space<vmem>>, %arg9: memref<1x8xf32, #tpu.memory_space<vmem>>, %arg10: memref<8x8xf32, #tpu.memory_space<vmem>>) attributes {dimension_semantics = [#tpu.dimension_semantics<parallel>], iteration_bounds = array<i64: 1>, scalar_prefetch = 0 : i64, scratch_operands = 0 : i64, tpu.core_type = #tpu.core_type<tc>, window_params = [{transform_indices = @transform_0, window_bounds = array<i64: 8, 256>}, {pipeline_mode = #tpu.pipeline_mode<synchronous>, transform_indices = @transform_1, window_bounds = array<i64: 256, 128>}, {pipeline_mode = #tpu.pipeline_mode<synchronous>, transform_indices = @transform_2, window_bounds = array<i64: 1, 128>}, {pipeline_mode = #tpu.pipeline_mode<synchronous>, transform_indices = @transform_3, window_bounds = array<i64: 128, 512>}, {pipeline_mode = #tpu.pipeline_mode<synchronous>, transform_indices = @transform_4, window_bounds = array<i64: 1, 512>}, {pipeline_mode = #tpu.pipeline_mode<synchronous>, transform_indices = @transform_5, window_bounds = array<i64: 512, 128>}, {pipeline_mode = #tpu.pipeline_mode<synchronous>, transform_indices = @transform_6, window_bounds = array<i64: 1, 128>}, {pipeline_mode = #tpu.pipeline_mode<synchronous>, transform_indices = @transform_7, window_bounds = array<i64: 128, 8>}, {pipeline_mode = #tpu.pipeline_mode<synchronous>, transform_indices = @transform_8, window_bounds = array<i64: 1, 8>}, {transform_indices = @transform_9, window_bounds = array<i64: 8, 8>}]} {
    %c0 = arith.constant 0 : index
    %c0_0 = arith.constant 0 : index
    %0 = vector.load %arg1[%c0, %c0_0] : memref<8x256xbf16, #tpu.memory_space<vmem>>, vector<8x256xbf16>
    %c0_1 = arith.constant 0 : index
    %c0_2 = arith.constant 0 : index
    %1 = vector.load %arg2[%c0_1, %c0_2] : memref<256x128xbf16, #tpu.memory_space<vmem>>, vector<256x128xbf16>
    %cst = arith.constant dense<0.000000e+00> : vector<8x128xf32>
    %2 = tpu.matmul %0, %1, %cst {dimension_numbers = #tpu.dot_dimension_numbers<[1], [0], [0], [1], [0, 0, 1, 1], [], []>} : vector<8x256xbf16>, vector<256x128xbf16>, vector<8x128xf32> -> vector<8x128xf32>
    %c0_3 = arith.constant 0 : index
    %c0_4 = arith.constant 0 : index
    %3 = vector.load %arg3[%c0_3, %c0_4] : memref<1x128xf32, #tpu.memory_space<vmem>>, vector<1x128xf32>
    %4 = vector.broadcast %3 : vector<1x128xf32> to vector<8x128xf32>
    %5 = arith.addf %2, %4 : vector<8x128xf32>
    %cst_5 = arith.constant 0.000000e+00 : f32
    %6 = vector.broadcast %cst_5 : f32 to vector<8x128xf32>
    %7 = arith.maximumf %5, %6 : vector<8x128xf32>
    %8 = arith.truncf %7 : vector<8x128xf32> to vector<8x128xbf16>
    %c0_6 = arith.constant 0 : index
    %c0_7 = arith.constant 0 : index
    %9 = vector.load %arg4[%c0_6, %c0_7] : memref<128x512xbf16, #tpu.memory_space<vmem>>, vector<128x512xbf16>
    %cst_8 = arith.constant dense<0.000000e+00> : vector<8x512xf32>
    %10 = tpu.matmul %8, %9, %cst_8 {dimension_numbers = #tpu.dot_dimension_numbers<[1], [0], [0], [1], [0, 0, 1, 1], [], []>} : vector<8x128xbf16>, vector<128x512xbf16>, vector<8x512xf32> -> vector<8x512xf32>
    %c0_9 = arith.constant 0 : index
    %c0_10 = arith.constant 0 : index
    %11 = vector.load %arg5[%c0_9, %c0_10] : memref<1x512xf32, #tpu.memory_space<vmem>>, vector<1x512xf32>
    %12 = vector.broadcast %11 : vector<1x512xf32> to vector<8x512xf32>
    %13 = arith.addf %10, %12 : vector<8x512xf32>
    %cst_11 = arith.constant 0.000000e+00 : f32
    %14 = vector.broadcast %cst_11 : f32 to vector<8x512xf32>
    %15 = arith.maximumf %13, %14 : vector<8x512xf32>
    %16 = arith.truncf %15 : vector<8x512xf32> to vector<8x512xbf16>
    %c0_12 = arith.constant 0 : index
    %c0_13 = arith.constant 0 : index
    %17 = vector.load %arg6[%c0_12, %c0_13] : memref<512x128xbf16, #tpu.memory_space<vmem>>, vector<512x128xbf16>
    %cst_14 = arith.constant dense<0.000000e+00> : vector<8x128xf32>
    %18 = tpu.matmul %16, %17, %cst_14 {dimension_numbers = #tpu.dot_dimension_numbers<[1], [0], [0], [1], [0, 0, 1, 1], [], []>} : vector<8x512xbf16>, vector<512x128xbf16>, vector<8x128xf32> -> vector<8x128xf32>
    %c0_15 = arith.constant 0 : index
    %c0_16 = arith.constant 0 : index
    %19 = vector.load %arg7[%c0_15, %c0_16] : memref<1x128xf32, #tpu.memory_space<vmem>>, vector<1x128xf32>
    %20 = vector.broadcast %19 : vector<1x128xf32> to vector<8x128xf32>
    %21 = arith.addf %18, %20 : vector<8x128xf32>
    %cst_17 = arith.constant 0.000000e+00 : f32
    %22 = vector.broadcast %cst_17 : f32 to vector<8x128xf32>
    %23 = arith.maximumf %21, %22 : vector<8x128xf32>
    %24 = arith.truncf %23 : vector<8x128xf32> to vector<8x128xbf16>
    %c0_18 = arith.constant 0 : index
    %c0_19 = arith.constant 0 : index
    %25 = vector.load %arg8[%c0_18, %c0_19] : memref<128x8xbf16, #tpu.memory_space<vmem>>, vector<128x8xbf16>
    %cst_20 = arith.constant dense<0.000000e+00> : vector<8x8xf32>
    %26 = tpu.matmul %24, %25, %cst_20 {dimension_numbers = #tpu.dot_dimension_numbers<[1], [0], [0], [1], [0, 0, 1, 1], [], []>} : vector<8x128xbf16>, vector<128x8xbf16>, vector<8x8xf32> -> vector<8x8xf32>
    %c0_21 = arith.constant 0 : index
    %c0_22 = arith.constant 0 : index
    %27 = vector.load %arg9[%c0_21, %c0_22] : memref<1x8xf32, #tpu.memory_space<vmem>>, vector<1x8xf32>
    %28 = vector.broadcast %27 : vector<1x8xf32> to vector<8x8xf32>
    %29 = arith.addf %26, %28 : vector<8x8xf32>
    %30 = arith.negf %29 : vector<8x8xf32>
    %31 = math.exp %30 : vector<8x8xf32>
    %cst_23 = arith.constant 1.000000e+00 : f32
    %32 = vector.broadcast %cst_23 : f32 to vector<8x8xf32>
    %33 = arith.addf %32, %31 : vector<8x8xf32>
    %34 = arith.divf %32, %33 : vector<8x8xf32>
    %c0_24 = arith.constant 0 : index
    %c0_25 = arith.constant 0 : index
    %35 = vector.load %arg10[%c0_24, %c0_25] : memref<8x8xf32, #tpu.memory_space<vmem>>, vector<8x8xf32>
    tpu.vector_store %arg10[%c0_24, %c0_25], %34 {strides = array<i32>} : memref<8x8xf32, #tpu.memory_space<vmem>>, vector<8x8xf32>,
    return
  }
  func.func @transform_0(%arg0: i32) -> (i32, i32) {
    %c0_i32 = arith.constant 0 : i32
    %c0_i32_0 = arith.constant 0 : i32
    return %arg0, %c0_i32 : i32, i32
  }
  func.func @transform_1(%arg0: i32) -> (i32, i32) {
    %c0_i32 = arith.constant 0 : i32
    %c0_i32_0 = arith.constant 0 : i32
    %c0_i32_1 = arith.constant 0 : i32
    return %c0_i32, %c0_i32_0 : i32, i32
  }
  func.func @transform_2(%arg0: i32) -> (i32, i32) {
    %c0_i32 = arith.constant 0 : i32
    %c0_i32_0 = arith.constant 0 : i32
    %c0_i32_1 = arith.constant 0 : i32
    return %c0_i32, %c0_i32_0 : i32, i32
  }
  func.func @transform_3(%arg0: i32) -> (i32, i32) {
    %c0_i32 = arith.constant 0 : i32
    %c0_i32_0 = arith.constant 0 : i32
    %c0_i32_1 = arith.constant 0 : i32
    return %c0_i32, %c0_i32_0 : i32, i32
  }
  func.func @transform_4(%arg0: i32) -> (i32, i32) {
    %c0_i32 = arith.constant 0 : i32
    %c0_i32_0 = arith.constant 0 : i32
    %c0_i32_1 = arith.constant 0 : i32
    return %c0_i32, %c0_i32_0 : i32, i32
  }
  func.func @transform_5(%arg0: i32) -> (i32, i32) {
    %c0_i32 = arith.constant 0 : i32
    %c0_i32_0 = arith.constant 0 : i32
    %c0_i32_1 = arith.constant 0 : i32
    return %c0_i32, %c0_i32_0 : i32, i32
  }
  func.func @transform_6(%arg0: i32) -> (i32, i32) {
    %c0_i32 = arith.constant 0 : i32
    %c0_i32_0 = arith.constant 0 : i32
    %c0_i32_1 = arith.constant 0 : i32
    return %c0_i32, %c0_i32_0 : i32, i32
  }
  func.func @transform_7(%arg0: i32) -> (i32, i32) {
    %c0_i32 = arith.constant 0 : i32
    %c0_i32_0 = arith.constant 0 : i32
    %c0_i32_1 = arith.constant 0 : i32
    return %c0_i32, %c0_i32_0 : i32, i32
  }
  func.func @transform_8(%arg0: i32) -> (i32, i32) {
    %c0_i32 = arith.constant 0 : i32
    %c0_i32_0 = arith.constant 0 : i32
    %c0_i32_1 = arith.constant 0 : i32
    return %c0_i32, %c0_i32_0 : i32, i32
  }
  func.func @transform_9(%arg0: i32) -> (i32, i32) {
    %c0_i32 = arith.constant 0 : i32
    %c0_i32_0 = arith.constant 0 : i32
    return %arg0, %c0_i32 : i32, i32
  }
}

</mosaic_0001>

<llo_original>
// kernel: mlp1_forward.1
$region0: #{mlp1_forward.1}
  #allocation0 [shape = 'u32[]', space=smem, size = 0x4, offset = 0x4, fixed_abs, tag = 'smem constant byte address 0x4 - core index']
  #allocation1 [shape = 'u32[72,128]{1,0:T(1,128)}', space=vmem, size = 0x9000, scoped, tag = 'internal scratch']
  %s0 = inlined_call_operand.vmem [shape: bf16[8,256], index: 0, kind: input, shape index: {}]
  %s1 = inlined_call_operand.hbm [shape: bf16[256,128], index: 1, kind: input, shape index: {}]
  %s2 = inlined_call_operand.vmem [shape: f32[1,128], index: 2, kind: input, shape index: {}]
  %s3 = inlined_call_operand.hbm [shape: bf16[128,512], index: 3, kind: input, shape index: {}]
  %s4 = inlined_call_operand.vmem [shape: f32[1,512], index: 4, kind: input, shape index: {}]
  %s5 = inlined_call_operand.hbm [shape: bf16[512,128], index: 5, kind: input, shape index: {}]
  %s6 = inlined_call_operand.vmem [shape: f32[1,128], index: 6, kind: input, shape index: {}]
  %s7 = inlined_call_operand.vmem [shape: bf16[128,8], index: 7, kind: input, shape index: {}]
  %s8 = inlined_call_operand.vmem [shape: f32[1,8], index: 8, kind: input, shape index: {}]
  %s9 = inlined_call_operand.vmem [shape: f32[8,8], index: 9, kind: output, shape index: {}]
  %s10 = sld [smem:[#allocation0]]
  $region58: #{mlp1_forward.1} parent=0
    _
  %s12 = ssub.s32 1, %s10
  %s13 = scalar_select 0, %s12, %s10
  $region1: #{mlp1_forward.1} parent=0
    #allocation2 [shape = 'u8[65536]{0}', space=vmem, size = 0x10000, scoped, tag = 'input window, operand 1, single buffered']
    #allocation3 [shape = 's32[1]{0}', space=sflag, size = 0x4, scoped, tag = 'scoped memory for mlp1_forward.1']
    #allocation4 [shape = 'u8[131072]{0}', space=vmem, size = 0x20000, scoped, tag = 'input window, operand 3, single buffered']
    #allocation5 [shape = 's32[1]{0}', space=sflag, size = 0x4, scoped, tag = 'scoped memory for mlp1_forward.1']
    #allocation6 [shape = 'u8[131072]{0}', space=vmem, size = 0x20000, scoped, tag = 'input window, operand 5, single buffered']
    %14 = vsyncpa [#allocation3], 0
    %15 = vsyncpa [#allocation5], 0
    // Predicated region
    $region2: #{mlp1_forward.1} parent=1 // pred_check
      _
    $region3: #{mlp1_forward.1} parent=1 // pred_check_branch
      %17 = sbr.rel (0) target = $region5
    $region4: #{mlp1_forward.1} parent=1 // pred_region
      _
    $region5: #{mlp1_forward.1} parent=1 // pred_fallthru
      _
    // Predicated region
    $region6: #{mlp1_forward.1} parent=1 // pred_check
      _
    $region7: #{mlp1_forward.1} parent=1 // pred_check_branch
      %19 = sbr.rel (0) target = $region9
    $region8: #{mlp1_forward.1} parent=1 // pred_region
      %21 = vsyncadd [#allocation3], 0
      %s22 = sshll.u32 %s1, 4
      %s23 = int_to_ptr.hbm [resolvable:$true] %s22
      %s24 = sshll.u32 [#allocation2], 4
      %s25 = int_to_ptr.vmem [resolvable:$true] %s24
      %30 = dma.hbm_to_vmem [thread:$0]  %s23, 2048, %s25, [#allocation3], 64, 64, 4
    $region9: #{mlp1_forward.1} parent=1 // pred_fallthru
      _
    // Predicated region
    $region10: #{mlp1_forward.1} parent=1 // pred_check
      _
    $region11: #{mlp1_forward.1} parent=1 // pred_check_branch
      %32 = sbr.rel (0) target = $region13
    $region12: #{mlp1_forward.1} parent=1 // pred_region
      _
    $region13: #{mlp1_forward.1} parent=1 // pred_fallthru
      _
    // Predicated region
    $region14: #{mlp1_forward.1} parent=1 // pred_check
      _
    $region15: #{mlp1_forward.1} parent=1 // pred_check_branch
      %34 = sbr.rel (0) target = $region17
    $region16: #{mlp1_forward.1} parent=1 // pred_region
      %36 = vsyncadd [#allocation5], 0
      %s37 = sshll.u32 %s3, 4
      %s38 = int_to_ptr.hbm [resolvable:$true] %s37
      %s39 = sshll.u32 [#allocation4], 4
      %s40 = int_to_ptr.vmem [resolvable:$true] %s39
      %45 = dma.hbm_to_vmem [thread:$0]  %s38, 4096, %s40, [#allocation5], 256, 256, 16
    $region17: #{mlp1_forward.1} parent=1 // pred_fallthru
      _
    // Predicated region
    $region18: #{mlp1_forward.1} parent=1 // pred_check
      _
    $region19: #{mlp1_forward.1} parent=1 // pred_check_branch
      %47 = sbr.rel (0) target = $region21
    $region20: #{mlp1_forward.1} parent=1 // pred_region
      _
    $region21: #{mlp1_forward.1} parent=1 // pred_fallthru
      _
    // Predicated region
    $region22: #{mlp1_forward.1} parent=1 // pred_check
      _
    $region23: #{mlp1_forward.1} parent=1 // pred_check_branch
      %49 = sbr.rel (0) target = $region25
    $region24: #{mlp1_forward.1} parent=1 // pred_region
      %51 = vsyncadd [#allocation5], 0
      %s52 = sshll.u32 %s5, 4
      %s53 = int_to_ptr.hbm [resolvable:$true] %s52
      %s54 = sshll.u32 [#allocation6], 4
      %s55 = int_to_ptr.vmem [resolvable:$true] %s54
      %60 = dma.hbm_to_vmem [thread:$0]  %s53, 4096, %s55, [#allocation5], 64, 64, 4
    $region25: #{mlp1_forward.1} parent=1 // pred_fallthru
      _
    // Predicated region
    $region26: #{mlp1_forward.1} parent=1 // pred_check
      _
    $region27: #{mlp1_forward.1} parent=1 // pred_check_branch
      %62 = sbr.rel (0) target = $region29
    $region28: #{mlp1_forward.1} parent=1 // pred_region
      _
    $region29: #{mlp1_forward.1} parent=1 // pred_fallthru
      _
    // Predicated region
    $region30: #{mlp1_forward.1} parent=1 // pred_check
      _
    $region31: #{mlp1_forward.1} parent=1 // pred_check_branch
      %64 = sbr.rel (0) target = $region33
    $region32: #{mlp1_forward.1} parent=1 // pred_region
      _
    $region33: #{mlp1_forward.1} parent=1 // pred_fallthru
      _
    // Predicated region
    $region34: #{mlp1_forward.1} parent=1 // pred_check
      _
    $region35: #{mlp1_forward.1} parent=1 // pred_check_branch
      %66 = sbr.rel (0) target = $region37
    $region36: #{mlp1_forward.1} parent=1 // pred_region
      _
    $region37: #{mlp1_forward.1} parent=1 // pred_fallthru
      _
    // Predicated region
    $region38: #{mlp1_forward.1} parent=1 // pred_check
      _
    $region39: #{mlp1_forward.1} parent=1 // pred_check_branch
      %68 = sbr.rel (0) target = $region41
    $region40: #{mlp1_forward.1} parent=1 // pred_region
      %70 = dma.done [#allocation3], 2048
    $region41: #{mlp1_forward.1} parent=1 // pred_fallthru
      _
    // Predicated region
    $region42: #{mlp1_forward.1} parent=1 // pred_check
      _
    $region43: #{mlp1_forward.1} parent=1 // pred_check_branch
      %72 = sbr.rel (0) target = $region45
    $region44: #{mlp1_forward.1} parent=1 // pred_region
      %74 = dma.done [#allocation5], 4096
    $region45: #{mlp1_forward.1} parent=1 // pred_fallthru
      _
    // Predicated region
    $region46: #{mlp1_forward.1} parent=1 // pred_check
      _
    $region47: #{mlp1_forward.1} parent=1 // pred_check_branch
      %76 = sbr.rel (0) target = $region49
    $region48: #{mlp1_forward.1} parent=1 // pred_region
      %78 = dma.done [#allocation5], 4096
    $region49: #{mlp1_forward.1} parent=1 // pred_fallthru
      _
    %v79 = vld [vmem:[%s0] sm:$0xff]
    %v80 = vld [vmem:[#allocation2] sm:$0xf]
    %v81 = vld [vmem:[#allocation2 + $0x4] sm:$0xf]
    %v82 = vld [vmem:[#allocation2 + $0x8] sm:$0xf]
    %v83 = vld [vmem:[#allocation2 + $0xc] sm:$0xf]
    %v84 = vld [vmem:[#allocation2 + $0x10] sm:$0xf]
    %v85 = vld [vmem:[#allocation2 + $0x14] sm:$0xf]
    %v86 = vld [vmem:[#allocation2 + $0x18] sm:$0xf]
    %v87 = vld [vmem:[#allocation2 + $0x1c] sm:$0xf]
    %v88 = vld [vmem:[#allocation2 + $0x20] sm:$0xf]
    %v89 = vld [vmem:[#allocation2 + $0x24] sm:$0xf]
    %v90 = vld [vmem:[#allocation2 + $0x28] sm:$0xf]
    %v91 = vld [vmem:[#allocation2 + $0x2c] sm:$0xf]
    %v92 = vld [vmem:[#allocation2 + $0x30] sm:$0xf]
    %v93 = vld [vmem:[#allocation2 + $0x34] sm:$0xf]
    %v94 = vld [vmem:[#allocation2 + $0x38] sm:$0xf]
    %v95 = vld [vmem:[#allocation2 + $0x3c] sm:$0xf]
    %v96 = vld [vmem:[#allocation2 + $0x40] sm:$0xf]
    %v97 = vld [vmem:[#allocation2 + $0x44] sm:$0xf]
    %v98 = vld [vmem:[#allocation2 + $0x48] sm:$0xf]
    %v99 = vld [vmem:[#allocation2 + $0x4c] sm:$0xf]
    %v100 = vld [vmem:[#allocation2 + $0x50] sm:$0xf]
    %v101 = vld [vmem:[#allocation2 + $0x54] sm:$0xf]
    %v102 = vld [vmem:[#allocation2 + $0x58] sm:$0xf]
    %v103 = vld [vmem:[#allocation2 + $0x5c] sm:$0xf]
    %v104 = vld [vmem:[#allocation2 + $0x60] sm:$0xf]
    %v105 = vld [vmem:[#allocation2 + $0x64] sm:$0xf]
    %v106 = vld [vmem:[#allocation2 + $0x68] sm:$0xf]
    %v107 = vld [vmem:[#allocation2 + $0x6c] sm:$0xf]
    %v108 = vld [vmem:[#allocation2 + $0x70] sm:$0xf]
    %v109 = vld [vmem:[#allocation2 + $0x74] sm:$0xf]
    %v110 = vld [vmem:[#allocation2 + $0x78] sm:$0xf]
    %v111 = vld [vmem:[#allocation2 + $0x7c] sm:$0xf]
    %v112 = vld [vmem:[%s2] sm:$0x1]
    %v114 = vperm.slane %v112, 0
    %v117 = vunpack.c.l.b16 %v79
    %v118 = vunpack.c.h.b16 %v79
    %v119 = vpack.c.b16 %v117, %v117
    %v120 = vpack.c.b16 %v118, %v118
    %v155 = vunpack.c.l.b16 %v80
    %v156 = vunpack.c.l.b16 %v81
    %v157 = vunpack.c.l.b16 %v82
    %v158 = vunpack.c.l.b16 %v83
    %v159 = vunpack.c.l.b16 %v84
    %v160 = vunpack.c.l.b16 %v85
    %v161 = vunpack.c.l.b16 %v86
    %v162 = vunpack.c.l.b16 %v87
    %v163 = vunpack.c.l.b16 %v88
    %v164 = vunpack.c.l.b16 %v89
    %v165 = vunpack.c.l.b16 %v90
    %v166 = vunpack.c.l.b16 %v91
    %v167 = vunpack.c.l.b16 %v92
    %v168 = vunpack.c.l.b16 %v93
    %v169 = vunpack.c.l.b16 %v94
    %v170 = vunpack.c.l.b16 %v95
    %v171 = vunpack.c.l.b16 %v96
    %v172 = vunpack.c.l.b16 %v97
    %v173 = vunpack.c.l.b16 %v98
    %v174 = vunpack.c.l.b16 %v99
    %v175 = vunpack.c.l.b16 %v100
    %v176 = vunpack.c.l.b16 %v101
    %v177 = vunpack.c.l.b16 %v102
    %v178 = vunpack.c.l.b16 %v103
    %v179 = vunpack.c.l.b16 %v104
    %v180 = vunpack.c.l.b16 %v105
    %v181 = vunpack.c.l.b16 %v106
    %v182 = vunpack.c.l.b16 %v107
    %v183 = vunpack.c.l.b16 %v108
    %v184 = vunpack.c.l.b16 %v109
    %v185 = vunpack.c.l.b16 %v110
    %v186 = vunpack.c.l.b16 %v111
    %v187 = vpack.c.b16 %v156, %v155
    %v188 = vpack.c.b16 %v158, %v157
    %v189 = vpack.c.b16 %v160, %v159
    %v190 = vpack.c.b16 %v162, %v161
    %v191 = vpack.c.b16 %v164, %v163
    %v192 = vpack.c.b16 %v166, %v165
    %v193 = vpack.c.b16 %v168, %v167
    %v194 = vpack.c.b16 %v170, %v169
    %v195 = vpack.c.b16 %v172, %v171
    %v196 = vpack.c.b16 %v174, %v173
    %v197 = vpack.c.b16 %v176, %v175
    %v198 = vpack.c.b16 %v178, %v177
    %v199 = vpack.c.b16 %v180, %v179
    %v200 = vpack.c.b16 %v182, %v181
    %v201 = vpack.c.b16 %v184, %v183
    %v202 = vpack.c.b16 %v186, %v185
    %219 = vmatpush.bf16.msra.mxu0 %v194
    %220 = vmatpush.bf16.msra.mxu0 %v193
    %221 = vmatpush.bf16.msra.mxu0 %v192
    %222 = vmatpush.bf16.msra.mxu0 %v191
    %223 = vmatpush.bf16.msra.mxu0 %v190
    %224 = vmatpush.bf16.msra.mxu0 %v189
    %225 = vmatpush.bf16.msra.mxu0 %v188
    %226 = vmatpush.bf16.msra.mxu0 %v187
    %227 = vmatmul.bf16.gmra.mxu0 %v119
    %v228 = vpop.f32.mrf.mxu0
    %v229 = vadd.f32 %v114, %v228
    %v230 = vpop.f32.mrf.mxu0
    %231 = vdwg.mxu0
    %232 = vmatpush.bf16.msra.mxu0 %v202
    %233 = vmatpush.bf16.msra.mxu0 %v201
    %234 = vmatpush.bf16.msra.mxu0 %v200
    %235 = vmatpush.bf16.msra.mxu0 %v199
    %236 = vmatpush.bf16.msra.mxu0 %v198
    %237 = vmatpush.bf16.msra.mxu0 %v197
    %238 = vmatpush.bf16.msra.mxu0 %v196
    %239 = vmatpush.bf16.msra.mxu0 %v195
    %240 = vmatmul.bf16.gmra.mxu0 %v120
    %v241 = vpop.f32.mrf.mxu0
    %v242 = vadd.f32 %v229, %v241
    %v243 = vpop.f32.mrf.mxu0
    %244 = vdwg.mxu0
    %v245 = vmax.f32 %v242, 0.0
    %v246 = vpack.c.bf16 %v245, %v245
    %v247 = vld [vmem:[#allocation4] sm:$0xff]
    %v248 = vld [vmem:[#allocation4 + $0x8] sm:$0xff]
    %v249 = vld [vmem:[#allocation4 + $0x10] sm:$0xff]
    %v250 = vld [vmem:[#allocation4 + $0x18] sm:$0xff]
    %v251 = vld [vmem:[#allocation4 + $0x20] sm:$0xff]
    %v252 = vld [vmem:[#allocation4 + $0x28] sm:$0xff]
    %v253 = vld [vmem:[#allocation4 + $0x30] sm:$0xff]
    %v254 = vld [vmem:[#allocation4 + $0x38] sm:$0xff]
    %v255 = vld [vmem:[#allocation4 + $0x40] sm:$0xff]
    %v256 = vld [vmem:[#allocation4 + $0x48] sm:$0xff]
    %v257 = vld [vmem:[#allocation4 + $0x50] sm:$0xff]
    %v258 = vld [vmem:[#allocation4 + $0x58] sm:$0xff]
    %v259 = vld [vmem:[#allocation4 + $0x60] sm:$0xff]
    %v260 = vld [vmem:[#allocation4 + $0x68] sm:$0xff]
    %v261 = vld [vmem:[#allocation4 + $0x70] sm:$0xff]
    %v262 = vld [vmem:[#allocation4 + $0x78] sm:$0xff]
    %v263 = vld [vmem:[#allocation4 + $0x80] sm:$0xff]
    %v264 = vld [vmem:[#allocation4 + $0x88] sm:$0xff]
    %v265 = vld [vmem:[#allocation4 + $0x90] sm:$0xff]
    %v266 = vld [vmem:[#allocation4 + $0x98] sm:$0xff]
    %v267 = vld [vmem:[#allocation4 + $0xa0] sm:$0xff]
    %v268 = vld [vmem:[#allocation4 + $0xa8] sm:$0xff]
    %v269 = vld [vmem:[#allocation4 + $0xb0] sm:$0xff]
    %v270 = vld [vmem:[#allocation4 + $0xb8] sm:$0xff]
    %v271 = vld [vmem:[#allocation4 + $0xc0] sm:$0xff]
    %v272 = vld [vmem:[#allocation4 + $0xc8] sm:$0xff]
    %v273 = vld [vmem:[#allocation4 + $0xd0] sm:$0xff]
    %v274 = vld [vmem:[#allocation4 + $0xd8] sm:$0xff]
    %v275 = vld [vmem:[#allocation4 + $0xe0] sm:$0xff]
    %v276 = vld [vmem:[#allocation4 + $0xe8] sm:$0xff]
    %v277 = vld [vmem:[#allocation4 + $0xf0] sm:$0xff]
    %v278 = vld [vmem:[#allocation4 + $0xf8] sm:$0xff]
    %v279 = vld [vmem:[%s4] sm:$0xf]
    %v281 = vperm.slane %v279, 0
    %v282 = vperm.slane %v279, 1
    %v283 = vperm.slane %v279, 2
    %v284 = vperm.slane %v279, 3
    %v321 = vunpack.c.l.b16 %v247
    %v322 = vunpack.c.h.b16 %v247
    %v323 = vunpack.c.l.b16 %v248
    %v324 = vunpack.c.h.b16 %v248
    %v325 = vunpack.c.l.b16 %v249
    %v326 = vunpack.c.h.b16 %v249
    %v327 = vunpack.c.l.b16 %v250
    %v328 = vunpack.c.h.b16 %v250
    %v329 = vunpack.c.l.b16 %v251
    %v330 = vunpack.c.h.b16 %v251
    %v331 = vunpack.c.l.b16 %v252
    %v332 = vunpack.c.h.b16 %v252
    %v333 = vunpack.c.l.b16 %v253
    %v334 = vunpack.c.h.b16 %v253
    %v335 = vunpack.c.l.b16 %v254
    %v336 = vunpack.c.h.b16 %v254
    %v337 = vunpack.c.l.b16 %v255
    %v338 = vunpack.c.h.b16 %v255
    %v339 = vunpack.c.l.b16 %v256
    %v340 = vunpack.c.h.b16 %v256
    %v341 = vunpack.c.l.b16 %v257
    %v342 = vunpack.c.h.b16 %v257
    %v343 = vunpack.c.l.b16 %v258
    %v344 = vunpack.c.h.b16 %v258
    %v345 = vunpack.c.l.b16 %v259
    %v346 = vunpack.c.h.b16 %v259
    %v347 = vunpack.c.l.b16 %v260
    %v348 = vunpack.c.h.b16 %v260
    %v349 = vunpack.c.l.b16 %v261
    %v350 = vunpack.c.h.b16 %v261
    %v351 = vunpack.c.l.b16 %v262
    %v352 = vunpack.c.h.b16 %v262
    %v353 = vunpack.c.l.b16 %v263
    %v354 = vunpack.c.h.b16 %v263
    %v355 = vunpack.c.l.b16 %v264
    %v356 = vunpack.c.h.b16 %v264
    %v357 = vunpack.c.l.b16 %v265
    %v358 = vunpack.c.h.b16 %v265
    %v359 = vunpack.c.l.b16 %v266
    %v360 = vunpack.c.h.b16 %v266
    %v361 = vunpack.c.l.b16 %v267
    %v362 = vunpack.c.h.b16 %v267
    %v363 = vunpack.c.l.b16 %v268
    %v364 = vunpack.c.h.b16 %v268
    %v365 = vunpack.c.l.b16 %v269
    %v366 = vunpack.c.h.b16 %v269
    %v367 = vunpack.c.l.b16 %v270
    %v368 = vunpack.c.h.b16 %v270
    %v369 = vunpack.c.l.b16 %v271
    %v370 = vunpack.c.h.b16 %v271
    %v371 = vunpack.c.l.b16 %v272
    %v372 = vunpack.c.h.b16 %v272
    %v373 = vunpack.c.l.b16 %v273
    %v374 = vunpack.c.h.b16 %v273
    %v375 = vunpack.c.l.b16 %v274
    %v376 = vunpack.c.h.b16 %v274
    %v377 = vunpack.c.l.b16 %v275
    %v378 = vunpack.c.h.b16 %v275
    %v379 = vunpack.c.l.b16 %v276
    %v380 = vunpack.c.h.b16 %v276
    %v381 = vunpack.c.l.b16 %v277
    %v382 = vunpack.c.h.b16 %v277
    %v383 = vunpack.c.l.b16 %v278
    %v384 = vunpack.c.h.b16 %v278
    %v385 = vpack.c.b16 %v325, %v321
    %v386 = vpack.c.b16 %v326, %v322
    %v387 = vpack.c.b16 %v327, %v323
    %v388 = vpack.c.b16 %v328, %v324
    %v389 = vpack.c.b16 %v333, %v329
    %v390 = vpack.c.b16 %v334, %v330
    %v391 = vpack.c.b16 %v335, %v331
    %v392 = vpack.c.b16 %v336, %v332
    %v393 = vpack.c.b16 %v341, %v337
    %v394 = vpack.c.b16 %v342, %v338
    %v395 = vpack.c.b16 %v343, %v339
    %v396 = vpack.c.b16 %v344, %v340
    %v397 = vpack.c.b16 %v349, %v345
    %v398 = vpack.c.b16 %v350, %v346
    %v399 = vpack.c.b16 %v351, %v347
    %v400 = vpack.c.b16 %v352, %v348
    %v401 = vpack.c.b16 %v357, %v353
    %v402 = vpack.c.b16 %v358, %v354
    %v403 = vpack.c.b16 %v359, %v355
    %v404 = vpack.c.b16 %v360, %v356
    %v405 = vpack.c.b16 %v365, %v361
    %v406 = vpack.c.b16 %v366, %v362
    %v407 = vpack.c.b16 %v367, %v363
    %v408 = vpack.c.b16 %v368, %v364
    %v409 = vpack.c.b16 %v373, %v369
    %v410 = vpack.c.b16 %v374, %v370
    %v411 = vpack.c.b16 %v375, %v371
    %v412 = vpack.c.b16 %v376, %v372
    %v413 = vpack.c.b16 %v381, %v377
    %v414 = vpack.c.b16 %v382, %v378
    %v415 = vpack.c.b16 %v383, %v379
    %v416 = vpack.c.b16 %v384, %v380
    %449 = vmatpush.bf16.msra.mxu0 %v413
    %450 = vmatpush.bf16.msra.mxu0 %v409
    %451 = vmatpush.bf16.msra.mxu0 %v405
    %452 = vmatpush.bf16.msra.mxu0 %v401
    %453 = vmatpush.bf16.msra.mxu0 %v397
    %454 = vmatpush.bf16.msra.mxu0 %v393
    %455 = vmatpush.bf16.msra.mxu0 %v389
    %456 = vmatpush.bf16.msra.mxu0 %v385
    %457 = vmatmul.bf16.gmra.mxu0 %v246
    %v458 = vpop.f32.mrf.mxu0
    %v459 = vadd.f32 %v281, %v458
    %v460 = vpop.f32.mrf.mxu0
    %461 = vdwg.mxu0
    %462 = vmatpush.bf16.msra.mxu0 %v414
    %463 = vmatpush.bf16.msra.mxu0 %v410
    %464 = vmatpush.bf16.msra.mxu0 %v406
    %465 = vmatpush.bf16.msra.mxu0 %v402
    %466 = vmatpush.bf16.msra.mxu0 %v398
    %467 = vmatpush.bf16.msra.mxu0 %v394
    %468 = vmatpush.bf16.msra.mxu0 %v390
    %469 = vmatpush.bf16.msra.mxu0 %v386
    %470 = vmatmul.bf16.gmra.mxu0 %v246
    %v471 = vpop.f32.mrf.mxu0
    %v472 = vadd.f32 %v282, %v471
    %v473 = vpop.f32.mrf.mxu0
    %474 = vdwg.mxu0
    %475 = vmatpush.bf16.msra.mxu0 %v415
    %476 = vmatpush.bf16.msra.mxu0 %v411
    %477 = vmatpush.bf16.msra.mxu0 %v407
    %478 = vmatpush.bf16.msra.mxu0 %v403
    %479 = vmatpush.bf16.msra.mxu0 %v399
    %480 = vmatpush.bf16.msra.mxu0 %v395
    %481 = vmatpush.bf16.msra.mxu0 %v391
    %482 = vmatpush.bf16.msra.mxu0 %v387
    %483 = vmatmul.bf16.gmra.mxu0 %v246
    %v484 = vpop.f32.mrf.mxu0
    %v485 = vadd.f32 %v283, %v484
    %v486 = vpop.f32.mrf.mxu0
    %487 = vdwg.mxu0
    %488 = vmatpush.bf16.msra.mxu0 %v416
    %489 = vmatpush.bf16.msra.mxu0 %v412
    %490 = vmatpush.bf16.msra.mxu0 %v408
    %491 = vmatpush.bf16.msra.mxu0 %v404
    %492 = vmatpush.bf16.msra.mxu0 %v400
    %493 = vmatpush.bf16.msra.mxu0 %v396
    %494 = vmatpush.bf16.msra.mxu0 %v392
    %495 = vmatpush.bf16.msra.mxu0 %v388
    %496 = vmatmul.bf16.gmra.mxu0 %v246
    %v497 = vpop.f32.mrf.mxu0
    %v498 = vadd.f32 %v284, %v497
    %v499 = vpop.f32.mrf.mxu0
    %500 = vdwg.mxu0
    %v501 = vmax.f32 %v459, 0.0
    %v502 = vmax.f32 %v472, 0.0
    %v503 = vmax.f32 %v485, 0.0
    %v504 = vmax.f32 %v498, 0.0
    %v505 = vpack.c.bf16 %v501, %v501
    %v506 = vpack.c.bf16 %v502, %v502
    %v507 = vpack.c.bf16 %v503, %v503
    %v508 = vpack.c.bf16 %v504, %v504
    %v509 = vld [vmem:[#allocation6] sm:$0xf]
    %v510 = vld [vmem:[#allocation6 + $0x4] sm:$0xf]
    %v511 = vld [vmem:[#allocation6 + $0x8] sm:$0xf]
    %v512 = vld [vmem:[#allocation6 + $0xc] sm:$0xf]
    %v513 = vld [vmem:[#allocation6 + $0x10] sm:$0xf]
    %v514 = vld [vmem:[#allocation6 + $0x14] sm:$0xf]
    %v515 = vld [vmem:[#allocation6 + $0x18] sm:$0xf]
    %v516 = vld [vmem:[#allocation6 + $0x1c] sm:$0xf]
    %v517 = vld [vmem:[#allocation6 + $0x20] sm:$0xf]
    %v518 = vld [vmem:[#allocation6 + $0x24] sm:$0xf]
    %v519 = vld [vmem:[#allocation6 + $0x28] sm:$0xf]
    %v520 = vld [vmem:[#allocation6 + $0x2c] sm:$0xf]
    %v521 = vld [vmem:[#allocation6 + $0x30] sm:$0xf]
    %v522 = vld [vmem:[#allocation6 + $0x34] sm:$0xf]
    %v523 = vld [vmem:[#allocation6 + $0x38] sm:$0xf]
    %v524 = vld [vmem:[#allocation6 + $0x3c] sm:$0xf]
    %v525 = vld [vmem:[#allocation6 + $0x40] sm:$0xf]
    %v526 = vld [vmem:[#allocation6 + $0x44] sm:$0xf]
    %v527 = vld [vmem:[#allocation6 + $0x48] sm:$0xf]
    %v528 = vld [vmem:[#allocation6 + $0x4c] sm:$0xf]
    %v529 = vld [vmem:[#allocation6 + $0x50] sm:$0xf]
    %v530 = vld [vmem:[#allocation6 + $0x54] sm:$0xf]
    %v531 = vld [vmem:[#allocation6 + $0x58] sm:$0xf]
    %v532 = vld [vmem:[#allocation6 + $0x5c] sm:$0xf]
    %v533 = vld [vmem:[#allocation6 + $0x60] sm:$0xf]
    %v534 = vld [vmem:[#allocation6 + $0x64] sm:$0xf]
    %v535 = vld [vmem:[#allocation6 + $0x68] sm:$0xf]
    %v536 = vld [vmem:[#allocation6 + $0x6c] sm:$0xf]
    %v537 = vld [vmem:[#allocation6 + $0x70] sm:$0xf]
    %v538 = vld [vmem:[#allocation6 + $0x74] sm:$0xf]
    %v539 = vld [vmem:[#allocation6 + $0x78] sm:$0xf]
    %v540 = vld [vmem:[#allocation6 + $0x7c] sm:$0xf]
    %v541 = vld [vmem:[#allocation6 + $0x80] sm:$0xf]
    %v542 = vld [vmem:[#allocation6 + $0x84] sm:$0xf]
    %v543 = vld [vmem:[#allocation6 + $0x88] sm:$0xf]
    %v544 = vld [vmem:[#allocation6 + $0x8c] sm:$0xf]
    %v545 = vld [vmem:[#allocation6 + $0x90] sm:$0xf]
    %v546 = vld [vmem:[#allocation6 + $0x94] sm:$0xf]
    %v547 = vld [vmem:[#allocation6 + $0x98] sm:$0xf]
    %v548 = vld [vmem:[#allocation6 + $0x9c] sm:$0xf]
    %v549 = vld [vmem:[#allocation6 + $0xa0] sm:$0xf]
    %v550 = vld [vmem:[#allocation6 + $0xa4] sm:$0xf]
    %v551 = vld [vmem:[#allocation6 + $0xa8] sm:$0xf]
    %v552 = vld [vmem:[#allocation6 + $0xac] sm:$0xf]
    %v553 = vld [vmem:[#allocation6 + $0xb0] sm:$0xf]
    %v554 = vld [vmem:[#allocation6 + $0xb4] sm:$0xf]
    %v555 = vld [vmem:[#allocation6 + $0xb8] sm:$0xf]
    %v556 = vld [vmem:[#allocation6 + $0xbc] sm:$0xf]
    %v557 = vld [vmem:[#allocation6 + $0xc0] sm:$0xf]
    %v558 = vld [vmem:[#allocation6 + $0xc4] sm:$0xf]
    %v559 = vld [vmem:[#allocation6 + $0xc8] sm:$0xf]
    %v560 = vld [vmem:[#allocation6 + $0xcc] sm:$0xf]
    %v561 = vld [vmem:[#allocation6 + $0xd0] sm:$0xf]
    %v562 = vld [vmem:[#allocation6 + $0xd4] sm:$0xf]
    %v563 = vld [vmem:[#allocation6 + $0xd8] sm:$0xf]
    %v564 = vld [vmem:[#allocation6 + $0xdc] sm:$0xf]
    %v565 = vld [vmem:[#allocation6 + $0xe0] sm:$0xf]
    %v566 = vld [vmem:[#allocation6 + $0xe4] sm:$0xf]
    %v567 = vld [vmem:[#allocation6 + $0xe8] sm:$0xf]
    %v568 = vld [vmem:[#allocation6 + $0xec] sm:$0xf]
    %v569 = vld [vmem:[#allocation6 + $0xf0] sm:$0xf]
    %v570 = vld [vmem:[#allocation6 + $0xf4] sm:$0xf]
    %v571 = vld [vmem:[#allocation6 + $0xf8] sm:$0xf]
    %v572 = vld [vmem:[#allocation6 + $0xfc] sm:$0xf]
    %v573 = vld [vmem:[%s6] sm:$0x1]
    %v575 = vperm.slane %v573, 0
    %v641 = vunpack.c.l.b16 %v509
    %v642 = vunpack.c.l.b16 %v510
    %v643 = vunpack.c.l.b16 %v511
    %v644 = vunpack.c.l.b16 %v512
    %v645 = vunpack.c.l.b16 %v513
    %v646 = vunpack.c.l.b16 %v514
    %v647 = vunpack.c.l.b16 %v515
    %v648 = vunpack.c.l.b16 %v516
    %v649 = vunpack.c.l.b16 %v517
    %v650 = vunpack.c.l.b16 %v518
    %v651 = vunpack.c.l.b16 %v519
    %v652 = vunpack.c.l.b16 %v520
    %v653 = vunpack.c.l.b16 %v521
    %v654 = vunpack.c.l.b16 %v522
    %v655 = vunpack.c.l.b16 %v523
    %v656 = vunpack.c.l.b16 %v524
    %v657 = vunpack.c.l.b16 %v525
    %v658 = vunpack.c.l.b16 %v526
    %v659 = vunpack.c.l.b16 %v527
    %v660 = vunpack.c.l.b16 %v528
    %v661 = vunpack.c.l.b16 %v529
    %v662 = vunpack.c.l.b16 %v530
    %v663 = vunpack.c.l.b16 %v531
    %v664 = vunpack.c.l.b16 %v532
    %v665 = vunpack.c.l.b16 %v533
    %v666 = vunpack.c.l.b16 %v534
    %v667 = vunpack.c.l.b16 %v535
    %v668 = vunpack.c.l.b16 %v536
    %v669 = vunpack.c.l.b16 %v537
    %v670 = vunpack.c.l.b16 %v538
    %v671 = vunpack.c.l.b16 %v539
    %v672 = vunpack.c.l.b16 %v540
    %v673 = vunpack.c.l.b16 %v541
    %v674 = vunpack.c.l.b16 %v542
    %v675 = vunpack.c.l.b16 %v543
    %v676 = vunpack.c.l.b16 %v544
    %v677 = vunpack.c.l.b16 %v545
    %v678 = vunpack.c.l.b16 %v546
    %v679 = vunpack.c.l.b16 %v547
    %v680 = vunpack.c.l.b16 %v548
    %v681 = vunpack.c.l.b16 %v549
    %v682 = vunpack.c.l.b16 %v550
    %v683 = vunpack.c.l.b16 %v551
    %v684 = vunpack.c.l.b16 %v552
    %v685 = vunpack.c.l.b16 %v553
    %v686 = vunpack.c.l.b16 %v554
    %v687 = vunpack.c.l.b16 %v555
    %v688 = vunpack.c.l.b16 %v556
    %v689 = vunpack.c.l.b16 %v557
    %v690 = vunpack.c.l.b16 %v558
    %v691 = vunpack.c.l.b16 %v559
    %v692 = vunpack.c.l.b16 %v560
    %v693 = vunpack.c.l.b16 %v561
    %v694 = vunpack.c.l.b16 %v562
    %v695 = vunpack.c.l.b16 %v563
    %v696 = vunpack.c.l.b16 %v564
    %v697 = vunpack.c.l.b16 %v565
    %v698 = vunpack.c.l.b16 %v566
    %v699 = vunpack.c.l.b16 %v567
    %v700 = vunpack.c.l.b16 %v568
    %v701 = vunpack.c.l.b16 %v569
    %v702 = vunpack.c.l.b16 %v570
    %v703 = vunpack.c.l.b16 %v571
    %v704 = vunpack.c.l.b16 %v572
    %v705 = vpack.c.b16 %v642, %v641
    %v706 = vpack.c.b16 %v644, %v643
    %v707 = vpack.c.b16 %v646, %v645
    %v708 = vpack.c.b16 %v648, %v647
    %v709 = vpack.c.b16 %v650, %v649
    %v710 = vpack.c.b16 %v652, %v651
    %v711 = vpack.c.b16 %v654, %v653
    %v712 = vpack.c.b16 %v656, %v655
    %v713 = vpack.c.b16 %v658, %v657
    %v714 = vpack.c.b16 %v660, %v659
    %v715 = vpack.c.b16 %v662, %v661
    %v716 = vpack.c.b16 %v664, %v663
    %v717 = vpack.c.b16 %v666, %v665
    %v718 = vpack.c.b16 %v668, %v667
    %v719 = vpack.c.b16 %v670, %v669
    %v720 = vpack.c.b16 %v672, %v671
    %v721 = vpack.c.b16 %v674, %v673
    %v722 = vpack.c.b16 %v676, %v675
    %v723 = vpack.c.b16 %v678, %v677
    %v724 = vpack.c.b16 %v680, %v679
    %v725 = vpack.c.b16 %v682, %v681
    %v726 = vpack.c.b16 %v684, %v683
    %v727 = vpack.c.b16 %v686, %v685
    %v728 = vpack.c.b16 %v688, %v687
    %v729 = vpack.c.b16 %v690, %v689
    %v730 = vpack.c.b16 %v692, %v691
    %v731 = vpack.c.b16 %v694, %v693
    %v732 = vpack.c.b16 %v696, %v695
    %v733 = vpack.c.b16 %v698, %v697
    %v734 = vpack.c.b16 %v700, %v699
    %v735 = vpack.c.b16 %v702, %v701
    %v736 = vpack.c.b16 %v704, %v703
    %769 = vmatpush.bf16.msra.mxu0 %v712
    %770 = vmatpush.bf16.msra.mxu0 %v711
    %771 = vmatpush.bf16.msra.mxu0 %v710
    %772 = vmatpush.bf16.msra.mxu0 %v709
    %773 = vmatpush.bf16.msra.mxu0 %v708
    %774 = vmatpush.bf16.msra.mxu0 %v707
    %775 = vmatpush.bf16.msra.mxu0 %v706
    %776 = vmatpush.bf16.msra.mxu0 %v705
    %777 = vmatmul.bf16.gmra.mxu0 %v505
    %v778 = vpop.f32.mrf.mxu0
    %v779 = vadd.f32 %v575, %v778
    %v780 = vpop.f32.mrf.mxu0
    %781 = vdwg.mxu0
    %782 = vmatpush.bf16.msra.mxu0 %v720
    %783 = vmatpush.bf16.msra.mxu0 %v719
    %784 = vmatpush.bf16.msra.mxu0 %v718
    %785 = vmatpush.bf16.msra.mxu0 %v717
    %786 = vmatpush.bf16.msra.mxu0 %v716
    %787 = vmatpush.bf16.msra.mxu0 %v715
    %788 = vmatpush.bf16.msra.mxu0 %v714
    %789 = vmatpush.bf16.msra.mxu0 %v713
    %790 = vmatmul.bf16.gmra.mxu0 %v506
    %v791 = vpop.f32.mrf.mxu0
    %v792 = vadd.f32 %v779, %v791
    %v793 = vpop.f32.mrf.mxu0
    %794 = vdwg.mxu0
    %795 = vmatpush.bf16.msra.mxu0 %v728
    %796 = vmatpush.bf16.msra.mxu0 %v727
    %797 = vmatpush.bf16.msra.mxu0 %v726
    %798 = vmatpush.bf16.msra.mxu0 %v725
    %799 = vmatpush.bf16.msra.mxu0 %v724
    %800 = vmatpush.bf16.msra.mxu0 %v723
    %801 = vmatpush.bf16.msra.mxu0 %v722
    %802 = vmatpush.bf16.msra.mxu0 %v721
    %803 = vmatmul.bf16.gmra.mxu0 %v507
    %v804 = vpop.f32.mrf.mxu0
    %v805 = vadd.f32 %v792, %v804
    %v806 = vpop.f32.mrf.mxu0
    %807 = vdwg.mxu0
    %808 = vmatpush.bf16.msra.mxu0 %v736
    %809 = vmatpush.bf16.msra.mxu0 %v735
    %810 = vmatpush.bf16.msra.mxu0 %v734
    %811 = vmatpush.bf16.msra.mxu0 %v733
    %812 = vmatpush.bf16.msra.mxu0 %v732
    %813 = vmatpush.bf16.msra.mxu0 %v731
    %814 = vmatpush.bf16.msra.mxu0 %v730
    %815 = vmatpush.bf16.msra.mxu0 %v729
    %816 = vmatmul.bf16.gmra.mxu0 %v508
    %v817 = vpop.f32.mrf.mxu0
    %v818 = vadd.f32 %v805, %v817
    %v819 = vpop.f32.mrf.mxu0
    %820 = vdwg.mxu0
    %v821 = vmax.f32 %v818, 0.0
    %v822 = vpack.c.bf16 %v821, %v821
    %v823 = vld [vmem:[%s7] sm:$0xf]
    %v824 = vld [vmem:[%s7 + $0x4] sm:$0xf]
    %v825 = vld [vmem:[%s7 + $0x8] sm:$0xf]
    %v826 = vld [vmem:[%s7 + $0xc] sm:$0xf]
    %v827 = vld [vmem:[%s7 + $0x10] sm:$0xf]
    %v828 = vld [vmem:[%s7 + $0x14] sm:$0xf]
    %v829 = vld [vmem:[%s7 + $0x18] sm:$0xf]
    %v830 = vld [vmem:[%s7 + $0x1c] sm:$0xf]
    %v831 = vld [vmem:[%s7 + $0x20] sm:$0xf]
    %v832 = vld [vmem:[%s7 + $0x24] sm:$0xf]
    %v833 = vld [vmem:[%s7 + $0x28] sm:$0xf]
    %v834 = vld [vmem:[%s7 + $0x2c] sm:$0xf]
    %v835 = vld [vmem:[%s7 + $0x30] sm:$0xf]
    %v836 = vld [vmem:[%s7 + $0x34] sm:$0xf]
    %v837 = vld [vmem:[%s7 + $0x38] sm:$0xf]
    %v838 = vld [vmem:[%s7 + $0x3c] sm:$0xf]
    %v839 = vld [vmem:[%s8] sm:$0x1]
    %v841 = vperm.slane %v839, 0
    %v859 = vunpack.c.l.b16 %v823
    %v860 = vunpack.c.l.b16 %v824
    %v861 = vunpack.c.l.b16 %v825
    %v862 = vunpack.c.l.b16 %v826
    %v863 = vunpack.c.l.b16 %v827
    %v864 = vunpack.c.l.b16 %v828
    %v865 = vunpack.c.l.b16 %v829
    %v866 = vunpack.c.l.b16 %v830
    %v867 = vunpack.c.l.b16 %v831
    %v868 = vunpack.c.l.b16 %v832
    %v869 = vunpack.c.l.b16 %v833
    %v870 = vunpack.c.l.b16 %v834
    %v871 = vunpack.c.l.b16 %v835
    %v872 = vunpack.c.l.b16 %v836
    %v873 = vunpack.c.l.b16 %v837
    %v874 = vunpack.c.l.b16 %v838
    %v875 = vpack.c.b16 %v860, %v859
    %v876 = vpack.c.b16 %v862, %v861
    %v877 = vpack.c.b16 %v864, %v863
    %v878 = vpack.c.b16 %v866, %v865
    %v879 = vpack.c.b16 %v868, %v867
    %v880 = vpack.c.b16 %v870, %v869
    %v881 = vpack.c.b16 %v872, %v871
    %v882 = vpack.c.b16 %v874, %v873
    %891 = vmatpush.bf16.msra.mxu0 %v882
    %892 = vmatpush.bf16.msra.mxu0 %v881
    %893 = vmatpush.bf16.msra.mxu0 %v880
    %894 = vmatpush.bf16.msra.mxu0 %v879
    %895 = vmatpush.bf16.msra.mxu0 %v878
    %896 = vmatpush.bf16.msra.mxu0 %v877
    %897 = vmatpush.bf16.msra.mxu0 %v876
    %898 = vmatpush.bf16.msra.mxu0 %v875
    %899 = vmatmul.bf16.gmra.mxu0 %v822
    %v900 = vpop.f32.mrf.mxu0
    %v901 = vadd.f32 %v841, %v900
    %v902 = vpop.f32.mrf.mxu0
    %903 = vdwg.mxu0
    %v904 = vxor.u32 %v901, 2147483648
    %v905 = vmul.f32 %v904, 1.442695
    %v906 = vpow.pop %v905
    %v907 = vadd.f32 %v906, 1.0
    %v908 = vrcp.pop %v907
    %v909 = vmul.f32 %v907, %v908
    %v910 = vsub.f32 1.0, %v909
    %v911 = vmul.f32 %v908, %v910
    %v912 = vadd.f32 %v908, %v911
    %vm913 = vweird.f32 %v907
    %vm914 = vweird.f32 %v908
    %vm915 = vmor %vm913, %vm914
    %v916 = vsel %vm915, %v908, %v912
    %v917 = vand.u32 2147483647, %v907
    %vm918 = vcmp.eq.f32.partialorder %v917, 8.507059e+37
    %v919 = vand.u32 %v907, 2147483648
    %v920 = vor.u32 1.1754944e-38, %v919
    %v921 = vsel %vm918, %v920, %v916
    %v922 = vmul.f32 1.0, %v921
    %vm923 = vcmask 64512
    %924 = vst.msk [vmem:[%s9] sm:$0xff] %vm923, %v922
    // Predicated region
    $region50: #{mlp1_forward.1} parent=1 // pred_check
      _
    $region51: #{mlp1_forward.1} parent=1 // pred_check_branch
      %926 = sbr.rel (0) target = $region53
    $region52: #{mlp1_forward.1} parent=1 // pred_region
      _
    $region53: #{mlp1_forward.1} parent=1 // pred_fallthru
      _
    // Predicated region
    $region54: #{mlp1_forward.1} parent=1 // pred_check
      _
    $region55: #{mlp1_forward.1} parent=1 // pred_check_branch
      %928 = sbr.rel (0) target = $region57
    $region56: #{mlp1_forward.1} parent=1 // pred_region
      _
    $region57: #{mlp1_forward.1} parent=1 // pred_fallthru
      _
    %929 = vsyncpa [#allocation3], 1
    %930 = vsyncpa [#allocation5], 1

</llo_original>
